<compile_context>
chip_gen: v5e
topology: v5e:2x2
jax: 0.10.0
libtpu: 0.0.40
codegen_flags: <defaults>
</compile_context>

<pallas_src>
import functools
import math

import jax
import jax.numpy as jnp
from jax import lax
from jax.experimental import pallas as pl
from jax.experimental.pallas import tpu as pltpu


DIM_H = 64                      # self.dim_h in the PyTorch module
MAX_TILE_B = 32768              # max batch-tile (rows) per grid step
VMEM_BUDGET_BYTES = 28 << 20    # budget for VMEM residents when picking tiles
VMEM_LIMIT_BYTES = 48 << 20     # scoped VMEM limit (safe on v7x's 64 MiB)


def _round_up(n, m):
    return ((n + m - 1) // m) * m


def _cdiv(a, b):
    return -(-a // b)


def _num_tensorcores():
    """2 on v7x (two TensorCores per chip), else 1 (v5e/v6e)."""
    try:
        kind = jax.devices()[0].device_kind.lower()
    except Exception:
        return 1
    return 2 if ("v7" in kind or "7x" in kind) else 1


def _mlp_kernel(x_ref, w1_ref, b1_ref, w2_ref, b2_ref, o_ref):
    # x_ref : (TB, d_in)   natural layout (no HBM-side transpose of x)
    # w1_ref: (H, d_in)    b1_ref: (H, 1)
    # w2_ref: (d_out, H)   b2_ref: (d_out, 1)
    # o_ref : (d_out, TB)  lane-dense output (batch on lanes)
    #
    # h[H, TB] = W1^T @ x^T : contract the last dims of both operands so the
    # x transpose is done on-chip; operands keep their input dtype (bf16 OK),
    # accumulation is f32 on the MXU.
    h = lax.dot_general(
        w1_ref[...], x_ref[...],
        dimension_numbers=(((1,), (1,)), ((), ())),
        preferred_element_type=jnp.float32)
    h = jnp.maximum(h + b1_ref[...], 0.0)            # bias + ReLU in f32
    # y[d_out, TB] = W2^T @ h ; identity cast when weights are f32, bf16
    # hidden feed when callers pass bf16 weights.
    y = lax.dot_general(
        w2_ref[...], h.astype(w2_ref.dtype),
        dimension_numbers=(((1,), (0,)), ((), ())),
        preferred_element_type=jnp.float32)
    o_ref[...] = (y + b2_ref[...]).astype(o_ref.dtype)


def _pick_tile_b(batch, d_in, d_out, in_bytes, out_bytes):
    """Largest batch tile under the VMEM budget; single tile on 1-TC chips."""
    # VMEM-resident bytes per batch row:
    #  - x block, double-buffered; its narrow minor dim is lane-padded to 128
    #  - f32 hidden slab (MXU result + post-ReLU temporary, conservative x3)
    #  - output block, double-buffered (sublane-padded to 8)
    per_row = (2 * _round_up(d_in, 128) * in_bytes
               + 3 * DIM_H * 4
               + 2 * _round_up(d_out, 8) * max(out_bytes, 4))
    cap = (VMEM_BUDGET_BYTES // per_row) // 128 * 128
    cap = max(128, min(MAX_TILE_B, cap))

    b_up = _round_up(batch, 8)          # sublane alignment only; no HBM pad
    n = _cdiv(b_up, cap)
    if n == 1 and b_up >= 256 and _num_tensorcores() >= 2:
        n = 2                           # give both v7x TensorCores a tile
    if n == 1:
        return b_up                     # one tile covering the whole batch
    return _round_up(_cdiv(b_up, n), 128)


@functools.partial(jax.jit, static_argnames=("tile_b",))
def _deep_reg_forward_impl(x, w1, b1, w2, b2, *, tile_b):
    batch, d_in = x.shape
    d_out = w2.shape[1]
    n_tiles = _cdiv(batch, tile_b)
    b_out = n_tiles * tile_b            # only the small output is tile-rounded

    w1_t = w1.T                                         # (H, d_in)   tiny
    w2_t = w2.T                                         # (d_out, H)  tiny
    b1_c = b1.reshape(DIM_H, 1).astype(jnp.float32)     # (H, 1)
    b2_c = b2.reshape(d_out, 1).astype(jnp.float32)     # (d_out, 1)

    in_bytes = jnp.dtype(x.dtype).itemsize
    cost = pl.CostEstimate(
        flops=2 * batch * DIM_H * (d_in + d_out),
        transcendentals=0,
        bytes_accessed=(batch * d_in * in_bytes
                        + batch * d_out * in_bytes
                        + (d_in * DIM_H + DIM_H + DIM_H * d_out + d_out) * 4))

    out_t = pl.pallas_call(
        _mlp_kernel,
        out_shape=jax.ShapeDtypeStruct((d_out, b_out), x.dtype),
        grid_spec=pltpu.PrefetchScalarGridSpec(
            num_scalar_prefetch=0,
            grid=(n_tiles,),
            in_specs=[
                # x streamed in natural layout; ragged last tile is handled by
                # the pipeline (garbage rows only affect sliced-off columns).
                pl.BlockSpec((tile_b, d_in), lambda i: (i, 0)),
                # Weights/biases: constant index_maps -> fetched once, resident.
                pl.BlockSpec((DIM_H, d_in), lambda i: (0, 0)),    # W1^T
                pl.BlockSpec((DIM_H, 1), lambda i: (0, 0)),       # b1
                pl.BlockSpec((d_out, DIM_H), lambda i: (0, 0)),   # W2^T
                pl.BlockSpec((d_out, 1), lambda i: (0, 0)),       # b2
            ],
            out_specs=pl.BlockSpec((d_out, tile_b), lambda i: (0, i)),
        ),
        compiler_params=pltpu.CompilerParams(
            dimension_semantics=("parallel",),   # batch tiles are independent
            vmem_limit_bytes=VMEM_LIMIT_BYTES,
        ),
        cost_estimate=cost,
    )(x, w1_t, b1_c, w2_t, b2_c)

    out = out_t[:, :batch].T            # (batch, d_out); tiny vs x stream
    # torch.squeeze removes ALL size-1 dims (out_shape=1 -> (B,); B=1 -> scalar)
    return jnp.squeeze(out)


def deep_reg_forward(x, w1, b1, w2, b2, *, tile_b=None):
    """Fused MLP forward: both matmuls + biases + ReLU in one Pallas kernel."""
    batch, d_in = x.shape
    d_out = w2.shape[1]
    if tile_b is None:
        nbytes = jnp.dtype(x.dtype).itemsize
        tile_b = _pick_tile_b(batch, d_in, d_out, nbytes, nbytes)
    return _deep_reg_forward_impl(x, w1, b1, w2, b2, tile_b=tile_b)


def init_params(key, in_shape, out_shape):
    """Deterministic init matching nn.Linear's U(-1/sqrt(fan_in), 1/sqrt(fan_in))."""
    k1, k2, k3, k4 = jax.random.split(key, 4)
    bound1 = 1.0 / math.sqrt(in_shape)
    bound2 = 1.0 / math.sqrt(DIM_H)
    w1 = jax.random.uniform(k1, (in_shape, DIM_H), jnp.float32, -bound1, bound1)
    b1 = jax.random.uniform(k2, (DIM_H,), jnp.float32, -bound1, bound1)
    w2 = jax.random.uniform(k3, (DIM_H, out_shape), jnp.float32, -bound2, bound2)
    b2 = jax.random.uniform(k4, (out_shape,), jnp.float32, -bound2, bound2)
    return w1, b1, w2, b2


if __name__ == "__main__":
    key = jax.random.PRNGKey(0)
    kx, kp = jax.random.split(key)

    B, in_shape, out_shape = 8, 4, 1
    x = jax.random.normal(kx, (B, in_shape), jnp.float32)
    w1, b1, w2, b2 = init_params(kp, in_shape, out_shape)

    y = deep_reg_forward(x, w1, b1, w2, b2)
    y = jax.block_until_ready(y)

    # Reference check in plain JAX (same semantics as the PyTorch module).
    ref = jnp.squeeze(jnp.maximum(x @ w1 + b1, 0.0) @ w2 + b2)
    assert y.shape == ref.shape == (B,)
    assert jnp.allclose(y, ref, atol=1e-5, rtol=1e-5)

    print("KERNEL_OK")
</pallas_src>

<mosaic_0001>
module attributes {stable_mosaic.version = 11 : i64} {
  func.func @_mlp_kernel(%arg0: i32, %arg1: memref<8x4xf32, #tpu.memory_space<vmem>>, %arg2: memref<64x4xf32, #tpu.memory_space<vmem>>, %arg3: memref<64x1xf32, #tpu.memory_space<vmem>>, %arg4: memref<1x64xf32, #tpu.memory_space<vmem>>, %arg5: memref<1x1xf32, #tpu.memory_space<vmem>>, %arg6: memref<1x8xf32, #tpu.memory_space<vmem>>) attributes {dimension_semantics = [#tpu.dimension_semantics<parallel>], iteration_bounds = array<i64: 1>, scalar_prefetch = 0 : i64, scratch_operands = 0 : i64, tpu.core_type = #tpu.core_type<tc>, window_params = [{transform_indices = @transform_0, window_bounds = array<i64: 8, 4>}, {pipeline_mode = #tpu.pipeline_mode<synchronous>, transform_indices = @transform_1, window_bounds = array<i64: 64, 4>}, {pipeline_mode = #tpu.pipeline_mode<synchronous>, transform_indices = @transform_2, window_bounds = array<i64: 64, 1>}, {pipeline_mode = #tpu.pipeline_mode<synchronous>, transform_indices = @transform_3, window_bounds = array<i64: 1, 64>}, {pipeline_mode = #tpu.pipeline_mode<synchronous>, transform_indices = @transform_4, window_bounds = array<i64: 1, 1>}, {transform_indices = @transform_5, window_bounds = array<i64: 1, 8>}]} {
    %c0 = arith.constant 0 : index
    %c0_0 = arith.constant 0 : index
    %0 = vector.load %arg2[%c0, %c0_0] : memref<64x4xf32, #tpu.memory_space<vmem>>, vector<64x4xf32>
    %c0_1 = arith.constant 0 : index
    %c0_2 = arith.constant 0 : index
    %1 = vector.load %arg1[%c0_1, %c0_2] : memref<8x4xf32, #tpu.memory_space<vmem>>, vector<8x4xf32>
    %cst = arith.constant dense<0.000000e+00> : vector<64x8xf32>
    %2 = tpu.matmul %0, %1, %cst {dimension_numbers = #tpu.dot_dimension_numbers<[1], [1], [0], [0], [0, 0, 1, 0], [], []>} : vector<64x4xf32>, vector<8x4xf32>, vector<64x8xf32> -> vector<64x8xf32>
    %c0_3 = arith.constant 0 : index
    %c0_4 = arith.constant 0 : index
    %3 = vector.load %arg3[%c0_3, %c0_4] : memref<64x1xf32, #tpu.memory_space<vmem>>, vector<64x1xf32>
    %4 = vector.broadcast %3 : vector<64x1xf32> to vector<64x8xf32>
    %5 = arith.addf %2, %4 : vector<64x8xf32>
    %cst_5 = arith.constant 0.000000e+00 : f32
    %6 = vector.broadcast %cst_5 : f32 to vector<64x8xf32>
    %7 = arith.maximumf %5, %6 : vector<64x8xf32>
    %c0_6 = arith.constant 0 : index
    %c0_7 = arith.constant 0 : index
    %8 = vector.load %arg4[%c0_6, %c0_7] : memref<1x64xf32, #tpu.memory_space<vmem>>, vector<1x64xf32>
    %cst_8 = arith.constant dense<0.000000e+00> : vector<1x8xf32>
    %9 = tpu.matmul %8, %7, %cst_8 {dimension_numbers = #tpu.dot_dimension_numbers<[1], [0], [0], [1], [0, 0, 1, 1], [], []>} : vector<1x64xf32>, vector<64x8xf32>, vector<1x8xf32> -> vector<1x8xf32>
    %c0_9 = arith.constant 0 : index
    %c0_10 = arith.constant 0 : index
    %10 = vector.load %arg5[%c0_9, %c0_10] : memref<1x1xf32, #tpu.memory_space<vmem>>, vector<1x1xf32>
    %11 = vector.broadcast %10 : vector<1x1xf32> to vector<1x8xf32>
    %12 = arith.addf %9, %11 : vector<1x8xf32>
    %c0_11 = arith.constant 0 : index
    %c0_12 = arith.constant 0 : index
    %13 = vector.load %arg6[%c0_11, %c0_12] : memref<1x8xf32, #tpu.memory_space<vmem>>, vector<1x8xf32>
    tpu.vector_store %arg6[%c0_11, %c0_12], %12 {strides = array<i32>} : memref<1x8xf32, #tpu.memory_space<vmem>>, vector<1x8xf32>,
    return
  }
  func.func @transform_0(%arg0: i32) -> (i32, i32) {
    %c0_i32 = arith.constant 0 : i32
    %c0_i32_0 = arith.constant 0 : i32
    return %arg0, %c0_i32 : i32, i32
  }
  func.func @transform_1(%arg0: i32) -> (i32, i32) {
    %c0_i32 = arith.constant 0 : i32
    %c0_i32_0 = arith.constant 0 : i32
    %c0_i32_1 = arith.constant 0 : i32
    return %c0_i32, %c0_i32_0 : i32, i32
  }
  func.func @transform_2(%arg0: i32) -> (i32, i32) {
    %c0_i32 = arith.constant 0 : i32
    %c0_i32_0 = arith.constant 0 : i32
    %c0_i32_1 = arith.constant 0 : i32
    return %c0_i32, %c0_i32_0 : i32, i32
  }
  func.func @transform_3(%arg0: i32) -> (i32, i32) {
    %c0_i32 = arith.constant 0 : i32
    %c0_i32_0 = arith.constant 0 : i32
    %c0_i32_1 = arith.constant 0 : i32
    return %c0_i32, %c0_i32_0 : i32, i32
  }
  func.func @transform_4(%arg0: i32) -> (i32, i32) {
    %c0_i32 = arith.constant 0 : i32
    %c0_i32_0 = arith.constant 0 : i32
    %c0_i32_1 = arith.constant 0 : i32
    return %c0_i32, %c0_i32_0 : i32, i32
  }
  func.func @transform_5(%arg0: i32) -> (i32, i32) {
    %c0_i32 = arith.constant 0 : i32
    %c0_i32_0 = arith.constant 0 : i32
    return %c0_i32, %arg0 : i32, i32
  }
}

</mosaic_0001>

<llo_original>
// kernel: _deep_reg_forward_impl.1
$region0: #{_deep_reg_forward_impl.1}
  #allocation0 [shape = 'u32[]', space=smem, size = 0x4, offset = 0x4, fixed_abs, tag = 'smem constant byte address 0x4 - core index']
  #allocation1 [shape = 'u32[72,128]{1,0:T(1,128)}', space=vmem, size = 0x9000, scoped, tag = 'internal scratch']
  #allocation2 [shape = 'f32[1,1]{1,0:T(1,128)S(1)}', space=vmem, size = 0x200, scoped, tag = 'scoped memory for _deep_reg_forward_impl.1']
  %s0 = inlined_call_operand.vmem [shape: f32[8,4], index: 0, kind: input, shape index: {}]
  %s1 = inlined_call_operand.vmem [shape: f32[64,4], index: 1, kind: input, shape index: {}]
  %s2 = inlined_call_operand.vmem [shape: f32[64,1], index: 2, kind: input, shape index: {}]
  %s3 = inlined_call_operand.vmem [shape: f32[1,64], index: 3, kind: input, shape index: {}]
  %s4 = inlined_call_operand.<no memory space> [shape: f32[1,1], index: 4, kind: input, shape index: {}]
  %s5 = inlined_call_operand.hbm [shape: f32[1,8], index: 5, kind: output, shape index: {}]
  %s6 = sld [smem:[#allocation0]]
  $region30: #{_deep_reg_forward_impl.1} parent=0
    _
  %s8 = ssub.s32 1, %s6
  %s9 = scalar_select 0, %s8, %s6
  %v10 = vstv %s4
  %11 = vst [vmem:[#allocation2] sm:$0x1] %v10
  $region1: #{_deep_reg_forward_impl.1} parent=0
    #allocation3 [shape = 'u8[512]{0}', space=vmem, size = 0x400, scoped, tag = 'output window, operand 0, single buffered']
    #allocation4 [shape = 's32[1]{0}', space=sflag, size = 0x4, scoped, tag = 'scoped memory for _deep_reg_forward_impl.1']
    %12 = vsyncpa [#allocation4], 0
    // Predicated region
    $region2: #{_deep_reg_forward_impl.1} parent=1 // pred_check
      _
    $region3: #{_deep_reg_forward_impl.1} parent=1 // pred_check_branch
      %14 = sbr.rel (0) target = $region5
    $region4: #{_deep_reg_forward_impl.1} parent=1 // pred_region
      _
    $region5: #{_deep_reg_forward_impl.1} parent=1 // pred_fallthru
      _
    // Predicated region
    $region6: #{_deep_reg_forward_impl.1} parent=1 // pred_check
      _
    $region7: #{_deep_reg_forward_impl.1} parent=1 // pred_check_branch
      %16 = sbr.rel (0) target = $region9
    $region8: #{_deep_reg_forward_impl.1} parent=1 // pred_region
      _
    $region9: #{_deep_reg_forward_impl.1} parent=1 // pred_fallthru
      _
    // Predicated region
    $region10: #{_deep_reg_forward_impl.1} parent=1 // pred_check
      _
    $region11: #{_deep_reg_forward_impl.1} parent=1 // pred_check_branch
      %18 = sbr.rel (0) target = $region13
    $region12: #{_deep_reg_forward_impl.1} parent=1 // pred_region
      _
    $region13: #{_deep_reg_forward_impl.1} parent=1 // pred_fallthru
      _
    // Predicated region
    $region14: #{_deep_reg_forward_impl.1} parent=1 // pred_check
      _
    $region15: #{_deep_reg_forward_impl.1} parent=1 // pred_check_branch
      %20 = sbr.rel (0) target = $region17
    $region16: #{_deep_reg_forward_impl.1} parent=1 // pred_region
      _
    $region17: #{_deep_reg_forward_impl.1} parent=1 // pred_fallthru
      _
    // Predicated region
    $region18: #{_deep_reg_forward_impl.1} parent=1 // pred_check
      _
    $region19: #{_deep_reg_forward_impl.1} parent=1 // pred_check_branch
      %22 = sbr.rel (0) target = $region21
    $region20: #{_deep_reg_forward_impl.1} parent=1 // pred_region
      _
    $region21: #{_deep_reg_forward_impl.1} parent=1 // pred_fallthru
      _
    %v23 = vld [vmem:[%s1] sm:$0xff]
    %v24 = vld [vmem:[%s1 + $0x8] sm:$0xff]
    %v25 = vld [vmem:[%s1 + $0x10] sm:$0xff]
    %v26 = vld [vmem:[%s1 + $0x18] sm:$0xff]
    %v27 = vld [vmem:[%s1 + $0x20] sm:$0xff]
    %v28 = vld [vmem:[%s1 + $0x28] sm:$0xff]
    %v29 = vld [vmem:[%s1 + $0x30] sm:$0xff]
    %v30 = vld [vmem:[%s1 + $0x38] sm:$0xff]
    %v31 = vld [vmem:[%s0] sm:$0xff]
    %v32 = vld [vmem:[%s2] sm:$0xff]
    %v33 = vld [vmem:[%s2 + $0x8] sm:$0xff]
    %v34 = vld [vmem:[%s2 + $0x10] sm:$0xff]
    %v35 = vld [vmem:[%s2 + $0x18] sm:$0xff]
    %v36 = vld [vmem:[%s2 + $0x20] sm:$0xff]
    %v37 = vld [vmem:[%s2 + $0x28] sm:$0xff]
    %v38 = vld [vmem:[%s2 + $0x30] sm:$0xff]
    %v39 = vld [vmem:[%s2 + $0x38] sm:$0xff]
    %41 = vset.pattern.permute.xlu0 0
    %42 = vperm.xlu0 %41, %v32
    %v43 = vpop.permute.xlu0 %42
    %46 = vset.pattern.permute.xlu0 0
    %47 = vperm.xlu0 %46, %v33
    %v48 = vpop.permute.xlu0 %47
    %51 = vset.pattern.permute.xlu0 0
    %52 = vperm.xlu0 %51, %v34
    %v53 = vpop.permute.xlu0 %52
    %56 = vset.pattern.permute.xlu0 0
    %57 = vperm.xlu0 %56, %v35
    %v58 = vpop.permute.xlu0 %57
    %61 = vset.pattern.permute.xlu0 0
    %62 = vperm.xlu0 %61, %v36
    %v63 = vpop.permute.xlu0 %62
    %66 = vset.pattern.permute.xlu0 0
    %67 = vperm.xlu0 %66, %v37
    %v68 = vpop.permute.xlu0 %67
    %71 = vset.pattern.permute.xlu0 0
    %72 = vperm.xlu0 %71, %v38
    %v73 = vpop.permute.xlu0 %72
    %76 = vset.pattern.permute.xlu0 0
    %77 = vperm.xlu0 %76, %v39
    %v78 = vpop.permute.xlu0 %77
    %vm80 = vcmask 31744
    %v82 = vsel %vm80, %v23, 0
    %v85 = vsel %vm80, %v24, 0
    %v88 = vsel %vm80, %v25, 0
    %v91 = vsel %vm80, %v26, 0
    %v94 = vsel %vm80, %v27, 0
    %v97 = vsel %vm80, %v28, 0
    %v100 = vsel %vm80, %v29, 0
    %v103 = vsel %vm80, %v30, 0
    %v106 = vsel %vm80, %v31, 0
    %108 = vmatpush.xpose.msra.mxu0 0.0
    %109 = vmatpush.xpose.msra.mxu0 0.0
    %110 = vmatpush.xpose.msra.mxu0 0.0
    %111 = vmatpush.xpose.msra.mxu0 0.0
    %112 = vmatpush.xpose.msra.mxu0 0.0
    %113 = vmatpush.xpose.msra.mxu0 0.0
    %114 = vmatpush.xpose.msra.mxu0 0.0
    %115 = vmatpush.xpose.msra.mxu0 0.0
    %116 = vmatpush.xpose.msra.mxu0 0.0
    %117 = vmatpush.xpose.msra.mxu0 0.0
    %118 = vmatpush.xpose.msra.mxu0 0.0
    %119 = vmatpush.xpose.msra.mxu0 0.0
    %120 = vmatpush.xpose.msra.mxu0 0.0
    %121 = vmatpush.xpose.msra.mxu0 0.0
    %122 = vmatpush.xpose.msra.mxu0 0.0
    %123 = vmatpush.xpose.msra.mxu0 %v106
    %124 = vmatmul.f32.gmra.mxu0 %v82
    %v125 = vpop.f32.mrf.mxu0
    %v126 = vadd.f32 %v43, %v125
    %127 = vmatmul.f32.gmra.mxu0 %v85
    %v128 = vpop.f32.mrf.mxu0
    %v129 = vadd.f32 %v48, %v128
    %130 = vmatmul.f32.gmra.mxu0 %v88
    %v131 = vpop.f32.mrf.mxu0
    %v132 = vadd.f32 %v53, %v131
    %133 = vmatmul.f32.gmra.mxu0 %v91
    %v134 = vpop.f32.mrf.mxu0
    %v135 = vadd.f32 %v58, %v134
    %136 = vmatmul.f32.gmra.mxu0 %v94
    %v137 = vpop.f32.mrf.mxu0
    %v138 = vadd.f32 %v63, %v137
    %139 = vmatmul.f32.gmra.mxu0 %v97
    %v140 = vpop.f32.mrf.mxu0
    %v141 = vadd.f32 %v68, %v140
    %142 = vmatmul.f32.gmra.mxu0 %v100
    %v143 = vpop.f32.mrf.mxu0
    %v144 = vadd.f32 %v73, %v143
    %145 = vmatmul.f32.gmra.mxu0 %v103
    %v146 = vpop.f32.mrf.mxu0
    %v147 = vadd.f32 %v78, %v146
    %148 = vdwg.mxu0
    %v149 = vmax.f32 %v126, 0.0
    %v150 = vmax.f32 %v129, 0.0
    %v151 = vmax.f32 %v132, 0.0
    %v152 = vmax.f32 %v135, 0.0
    %v153 = vmax.f32 %v138, 0.0
    %v154 = vmax.f32 %v141, 0.0
    %v155 = vmax.f32 %v144, 0.0
    %v156 = vmax.f32 %v147, 0.0
    %v157 = vld [vmem:[%s3] sm:$0x1]
    %v158 = vld [vmem:[#allocation2] sm:$0x1]
    %160 = vset.pattern.permute.xlu0 0
    %161 = vperm.xlu0 %160, %v158
    %v162 = vpop.permute.xlu0 %161
    %v164 = vperm.slane %v162, 0
    %vm165 = vcmask 523264
    %v167 = vsel %vm165, %v157, 0
    %169 = vmatpush.msra.mxu0 0.0
    %170 = vmatpush.msra.mxu0 0.0
    %171 = vmatpush.msra.mxu0 0.0
    %172 = vmatpush.msra.mxu0 0.0
    %173 = vmatpush.msra.mxu0 0.0
    %174 = vmatpush.msra.mxu0 0.0
    %175 = vmatpush.msra.mxu0 0.0
    %176 = vmatpush.msra.mxu0 0.0
    %177 = vmatpush.msra.mxu0 %v156
    %178 = vmatpush.msra.mxu0 %v155
    %179 = vmatpush.msra.mxu0 %v154
    %180 = vmatpush.msra.mxu0 %v153
    %181 = vmatpush.msra.mxu0 %v152
    %182 = vmatpush.msra.mxu0 %v151
    %183 = vmatpush.msra.mxu0 %v150
    %184 = vmatpush.msra.mxu0 %v149
    %185 = vmatmul.f32.gmra.mxu0 %v167
    %v186 = vpop.f32.mrf.mxu0
    %v187 = vadd.f32 %v164, %v186
    %188 = vdwg.mxu0
    %vm189 = vcmask 57344
    %190 = vst.msk [vmem:[#allocation3] sm:$0x1] %vm189, %v187
    // Predicated region
    $region22: #{_deep_reg_forward_impl.1} parent=1 // pred_check
      _
    $region23: #{_deep_reg_forward_impl.1} parent=1 // pred_check_branch
      %192 = sbr.rel (0) target = $region25
    $region24: #{_deep_reg_forward_impl.1} parent=1 // pred_region
      %194 = vsyncadd [#allocation4], 0
      %s196 = sshll.u32 [#allocation3], 4
      %s197 = int_to_ptr.vmem [resolvable:$true] %s196
      %s198 = sshll.u32 %s5, 4
      %s199 = int_to_ptr.hbm [resolvable:$true] %s198
      %201 = dma.vmem_to_hbm [thread:$0]  %s197, 16, %s199, [#allocation4]
    $region25: #{_deep_reg_forward_impl.1} parent=1 // pred_fallthru
      _
    // Predicated region
    $region26: #{_deep_reg_forward_impl.1} parent=1 // pred_check
      _
    $region27: #{_deep_reg_forward_impl.1} parent=1 // pred_check_branch
      %203 = sbr.rel (0) target = $region29
    $region28: #{_deep_reg_forward_impl.1} parent=1 // pred_region
      %205 = dma.done [#allocation4], 16
    $region29: #{_deep_reg_forward_impl.1} parent=1 // pred_fallthru
      _
    %206 = vsyncpa [#allocation4], 1

</llo_original>
